<compile_context>
chip_gen: v5e
topology: v5e:2x2
jax: 0.10.0
libtpu: 0.0.40
codegen_flags: <defaults>
</compile_context>

<pallas_src>
import jax
import jax.numpy as jnp
from jax.experimental import pallas as pl
from jax.experimental.pallas import tpu as pltpu

LANES = 128


def mlp_kernel(x_ref, w1_ref, b1_ref, w2_ref, b2_ref, o_ref):
    # x_ref: (1, TN) with batch on lanes
    # w1_ref, b1_ref, w2_ref: (H, 1); b2_ref: (1, 1)
    x = x_ref[...]                                          # (1, TN)
    # hidden = relu(w1 * x + b1): K=1 "matmul" done on the VPU, no MXU push.
    h = jnp.maximum(w1_ref[...] * x + b1_ref[...], 0.0)     # (H, TN)
    # predict = sum_h(w2[h] * hidden[h]) + b2: VPU mul + XLU sublane reduce.
    y = jnp.sum(h * w2_ref[...], axis=0, keepdims=True)     # (1, TN)
    o_ref[...] = (y + b2_ref[...]).astype(o_ref.dtype)      # lane-dense store


def net_forward(x, w1, b1, w2, b2, *, block_n=2048):
    """x: (N, 1) f32; w1: (1, H); b1: (1, H); w2: (H, 1); b2: (1, 1).
    Returns (N, 1) f32 == relu(x @ w1 + b1) @ w2 + b2."""
    N, n_feature = x.shape
    n_hidden = w1.shape[1]
    n_output = w2.shape[1]
    assert n_feature == 1 and n_output == 1, (
        "kernel is specialized for the Net(1, H, 1) regression module")

    # Lane-dense tile along the batch axis: at least 128 lanes, at most
    # block_n, and never larger than the (lane-rounded) batch itself.
    n_round = ((N + LANES - 1) // LANES) * LANES
    tile_n = max(LANES, min(block_n, n_round))
    n_pad = ((N + tile_n - 1) // tile_n) * tile_n
    grid = (n_pad // tile_n,)

    # Layout plumbing (wrapper side, not compute): batch -> lanes,
    # params -> per-sublane column vectors.  Padded lanes carry garbage
    # (relu(b1) etc.) but are sliced off and never reduced over.
    x_t = jnp.pad(x.astype(jnp.float32).T, ((0, 0), (0, n_pad - N)))  # (1, Np)
    w1_col = w1.reshape(n_hidden, 1).astype(jnp.float32)
    b1_col = b1.reshape(n_hidden, 1).astype(jnp.float32)
    w2_col = w2.reshape(n_hidden, 1).astype(jnp.float32)
    b2_col = b2.reshape(1, 1).astype(jnp.float32)

    # Advisory cost hint so XLA doesn't over-schedule around a ~us kernel.
    cost = pl.CostEstimate(
        flops=5 * n_hidden * n_pad,
        transcendentals=0,
        bytes_accessed=4 * (2 * n_pad + 3 * n_hidden + 1),
    )

    out_t = pl.pallas_call(
        mlp_kernel,
        out_shape=jax.ShapeDtypeStruct((1, n_pad), jnp.float32),
        grid=grid,
        in_specs=[
            pl.BlockSpec((1, tile_n), lambda i: (0, i)),      # x tile on lanes
            pl.BlockSpec((n_hidden, 1), lambda i: (0, 0)),    # w1 (resident)
            pl.BlockSpec((n_hidden, 1), lambda i: (0, 0)),    # b1
            pl.BlockSpec((n_hidden, 1), lambda i: (0, 0)),    # w2
            pl.BlockSpec((1, 1), lambda i: (0, 0)),           # b2
        ],
        out_specs=pl.BlockSpec((1, tile_n), lambda i: (0, i)),
        compiler_params=pltpu.CompilerParams(
            dimension_semantics=("parallel",)),               # megacore-shardable
        cost_estimate=cost,
    )(x_t, w1_col, b1_col, w2_col, b2_col)

    # Back to the PyTorch layout (N, n_output).
    return out_t[0, :N][:, None]


def init_params(key, n_feature, n_hidden, n_output):
    """Deterministic init mimicking torch.nn.Linear default U[-1/sqrt(in), 1/sqrt(in)]."""
    k1, k2, k3, k4 = jax.random.split(key, 4)
    bound1 = 1.0 / jnp.sqrt(jnp.float32(n_feature))
    bound2 = 1.0 / jnp.sqrt(jnp.float32(n_hidden))
    w1 = jax.random.uniform(k1, (n_feature, n_hidden), jnp.float32, -bound1, bound1)
    b1 = jax.random.uniform(k2, (1, n_hidden), jnp.float32, -bound1, bound1)
    w2 = jax.random.uniform(k3, (n_hidden, n_output), jnp.float32, -bound2, bound2)
    b2 = jax.random.uniform(k4, (1, n_output), jnp.float32, -bound2, bound2)
    return w1, b1, w2, b2


if __name__ == "__main__":
    n_feature, n_hidden, n_output = 1, 32, 1
    N = 100  # mirrors torch.linspace(-1, 1, 100).unsqueeze(1)

    key = jax.random.PRNGKey(0)
    w1, b1, w2, b2 = init_params(key, n_feature, n_hidden, n_output)

    # input: same as the PyTorch script's x
    x = jnp.linspace(-1.0, 1.0, N, dtype=jnp.float32)[:, None]  # (100, 1)

    out = net_forward(x, w1, b1, w2, b2)
    out = jax.block_until_ready(out)

    # reference check in plain JAX
    ref = jnp.maximum(x @ w1 + b1, 0.0) @ w2 + b2
    assert out.shape == (N, n_output)
    assert jnp.allclose(out, ref, atol=1e-5, rtol=1e-5)

    print("KERNEL_OK")
</pallas_src>

<mosaic_0001>
module attributes {stable_mosaic.version = 11 : i64} {
  func.func @mlp_kernel(%arg0: i32, %arg1: memref<1x128xf32, #tpu.memory_space<vmem>>, %arg2: memref<32x1xf32, #tpu.memory_space<vmem>>, %arg3: memref<32x1xf32, #tpu.memory_space<vmem>>, %arg4: memref<32x1xf32, #tpu.memory_space<vmem>>, %arg5: memref<1x1xf32, #tpu.memory_space<vmem>>, %arg6: memref<1x128xf32, #tpu.memory_space<vmem>>) attributes {dimension_semantics = [#tpu.dimension_semantics<parallel>], iteration_bounds = array<i64: 1>, scalar_prefetch = 0 : i64, scratch_operands = 0 : i64, tpu.core_type = #tpu.core_type<tc>, window_params = [{transform_indices = @transform_0, window_bounds = array<i64: 1, 128>}, {pipeline_mode = #tpu.pipeline_mode<synchronous>, transform_indices = @transform_1, window_bounds = array<i64: 32, 1>}, {pipeline_mode = #tpu.pipeline_mode<synchronous>, transform_indices = @transform_2, window_bounds = array<i64: 32, 1>}, {pipeline_mode = #tpu.pipeline_mode<synchronous>, transform_indices = @transform_3, window_bounds = array<i64: 32, 1>}, {pipeline_mode = #tpu.pipeline_mode<synchronous>, transform_indices = @transform_4, window_bounds = array<i64: 1, 1>}, {transform_indices = @transform_5, window_bounds = array<i64: 1, 128>}]} {
    %c0 = arith.constant 0 : index
    %c0_0 = arith.constant 0 : index
    %0 = vector.load %arg1[%c0, %c0_0] : memref<1x128xf32, #tpu.memory_space<vmem>>, vector<1x128xf32>
    %c0_1 = arith.constant 0 : index
    %c0_2 = arith.constant 0 : index
    %1 = vector.load %arg2[%c0_1, %c0_2] : memref<32x1xf32, #tpu.memory_space<vmem>>, vector<32x1xf32>
    %2 = vector.broadcast %1 : vector<32x1xf32> to vector<32x128xf32>
    %3 = vector.broadcast %0 : vector<1x128xf32> to vector<32x128xf32>
    %4 = arith.mulf %2, %3 : vector<32x128xf32>
    %c0_3 = arith.constant 0 : index
    %c0_4 = arith.constant 0 : index
    %5 = vector.load %arg3[%c0_3, %c0_4] : memref<32x1xf32, #tpu.memory_space<vmem>>, vector<32x1xf32>
    %6 = vector.broadcast %5 : vector<32x1xf32> to vector<32x128xf32>
    %7 = arith.addf %4, %6 : vector<32x128xf32>
    %cst = arith.constant 0.000000e+00 : f32
    %8 = vector.broadcast %cst : f32 to vector<32x128xf32>
    %9 = arith.maximumf %7, %8 : vector<32x128xf32>
    %c0_5 = arith.constant 0 : index
    %c0_6 = arith.constant 0 : index
    %10 = vector.load %arg4[%c0_5, %c0_6] : memref<32x1xf32, #tpu.memory_space<vmem>>, vector<32x1xf32>
    %11 = vector.broadcast %10 : vector<32x1xf32> to vector<32x128xf32>
    %12 = arith.mulf %9, %11 : vector<32x128xf32>
    %cst_7 = arith.constant dense<0.000000e+00> : vector<128xf32>
    %13 = vector.multi_reduction <add>, %12, %cst_7 [0] : vector<32x128xf32> to vector<128xf32>
    %14 = vector.shape_cast %13 : vector<128xf32> to vector<1x128xf32>
    %c0_8 = arith.constant 0 : index
    %c0_9 = arith.constant 0 : index
    %15 = vector.load %arg5[%c0_8, %c0_9] : memref<1x1xf32, #tpu.memory_space<vmem>>, vector<1x1xf32>
    %16 = vector.broadcast %15 : vector<1x1xf32> to vector<1x128xf32>
    %17 = arith.addf %14, %16 : vector<1x128xf32>
    %c0_10 = arith.constant 0 : index
    %c0_11 = arith.constant 0 : index
    %18 = vector.load %arg6[%c0_10, %c0_11] : memref<1x128xf32, #tpu.memory_space<vmem>>, vector<1x128xf32>
    tpu.vector_store %arg6[%c0_10, %c0_11], %17 {strides = array<i32>} : memref<1x128xf32, #tpu.memory_space<vmem>>, vector<1x128xf32>,
    return
  }
  func.func @transform_0(%arg0: i32) -> (i32, i32) {
    %c0_i32 = arith.constant 0 : i32
    %c0_i32_0 = arith.constant 0 : i32
    return %c0_i32, %arg0 : i32, i32
  }
  func.func @transform_1(%arg0: i32) -> (i32, i32) {
    %c0_i32 = arith.constant 0 : i32
    %c0_i32_0 = arith.constant 0 : i32
    %c0_i32_1 = arith.constant 0 : i32
    return %c0_i32, %c0_i32_0 : i32, i32
  }
  func.func @transform_2(%arg0: i32) -> (i32, i32) {
    %c0_i32 = arith.constant 0 : i32
    %c0_i32_0 = arith.constant 0 : i32
    %c0_i32_1 = arith.constant 0 : i32
    return %c0_i32, %c0_i32_0 : i32, i32
  }
  func.func @transform_3(%arg0: i32) -> (i32, i32) {
    %c0_i32 = arith.constant 0 : i32
    %c0_i32_0 = arith.constant 0 : i32
    %c0_i32_1 = arith.constant 0 : i32
    return %c0_i32, %c0_i32_0 : i32, i32
  }
  func.func @transform_4(%arg0: i32) -> (i32, i32) {
    %c0_i32 = arith.constant 0 : i32
    %c0_i32_0 = arith.constant 0 : i32
    %c0_i32_1 = arith.constant 0 : i32
    return %c0_i32, %c0_i32_0 : i32, i32
  }
  func.func @transform_5(%arg0: i32) -> (i32, i32) {
    %c0_i32 = arith.constant 0 : i32
    %c0_i32_0 = arith.constant 0 : i32
    return %c0_i32, %arg0 : i32, i32
  }
}

</mosaic_0001>

<llo_original>
// kernel: tpu_custom_call.1
$region0: #{tpu_custom_call.1}
  #allocation0 [shape = 'u32[]', space=smem, size = 0x4, offset = 0x4, fixed_abs, tag = 'smem constant byte address 0x4 - core index']
  #allocation1 [shape = 'u32[72,128]{1,0:T(1,128)}', space=vmem, size = 0x9000, scoped, tag = 'internal scratch']
  #allocation2 [shape = 'f32[1,1]{1,0:T(1,128)S(1)}', space=vmem, size = 0x200, scoped, tag = 'scoped memory for tpu_custom_call.1']
  %s0 = inlined_call_operand.vmem [shape: f32[1,128], index: 0, kind: input, shape index: {}]
  %s1 = inlined_call_operand.vmem [shape: f32[32,1], index: 1, kind: input, shape index: {}]
  %s2 = inlined_call_operand.vmem [shape: f32[32,1], index: 2, kind: input, shape index: {}]
  %s3 = inlined_call_operand.vmem [shape: f32[32,1], index: 3, kind: input, shape index: {}]
  %s4 = inlined_call_operand.<no memory space> [shape: f32[1,1], index: 4, kind: input, shape index: {}]
  %s5 = inlined_call_operand.hbm [shape: f32[1,128], index: 5, kind: output, shape index: {}]
  %s6 = sld [smem:[#allocation0]]
  $region30: #{tpu_custom_call.1} parent=0
    _
  %s8 = ssub.s32 1, %s6
  %s9 = scalar_select 0, %s8, %s6
  %v10 = vstv %s4
  %11 = vst [vmem:[#allocation2] sm:$0x1] %v10
  $region1: #{tpu_custom_call.1} parent=0
    #allocation3 [shape = 'u8[512]{0}', space=vmem, size = 0x400, scoped, tag = 'output window, operand 0, single buffered']
    #allocation4 [shape = 's32[1]{0}', space=sflag, size = 0x4, scoped, tag = 'scoped memory for tpu_custom_call.1']
    %12 = vsyncpa [#allocation4], 0
    // Predicated region
    $region2: #{tpu_custom_call.1} parent=1 // pred_check
      _
    $region3: #{tpu_custom_call.1} parent=1 // pred_check_branch
      %14 = sbr.rel (0) target = $region5
    $region4: #{tpu_custom_call.1} parent=1 // pred_region
      _
    $region5: #{tpu_custom_call.1} parent=1 // pred_fallthru
      _
    // Predicated region
    $region6: #{tpu_custom_call.1} parent=1 // pred_check
      _
    $region7: #{tpu_custom_call.1} parent=1 // pred_check_branch
      %16 = sbr.rel (0) target = $region9
    $region8: #{tpu_custom_call.1} parent=1 // pred_region
      _
    $region9: #{tpu_custom_call.1} parent=1 // pred_fallthru
      _
    // Predicated region
    $region10: #{tpu_custom_call.1} parent=1 // pred_check
      _
    $region11: #{tpu_custom_call.1} parent=1 // pred_check_branch
      %18 = sbr.rel (0) target = $region13
    $region12: #{tpu_custom_call.1} parent=1 // pred_region
      _
    $region13: #{tpu_custom_call.1} parent=1 // pred_fallthru
      _
    // Predicated region
    $region14: #{tpu_custom_call.1} parent=1 // pred_check
      _
    $region15: #{tpu_custom_call.1} parent=1 // pred_check_branch
      %20 = sbr.rel (0) target = $region17
    $region16: #{tpu_custom_call.1} parent=1 // pred_region
      _
    $region17: #{tpu_custom_call.1} parent=1 // pred_fallthru
      _
    // Predicated region
    $region18: #{tpu_custom_call.1} parent=1 // pred_check
      _
    $region19: #{tpu_custom_call.1} parent=1 // pred_check_branch
      %22 = sbr.rel (0) target = $region21
    $region20: #{tpu_custom_call.1} parent=1 // pred_region
      _
    $region21: #{tpu_custom_call.1} parent=1 // pred_fallthru
      _
    %v23 = vld [vmem:[%s0] sm:$0x1]
    %v24 = vld [vmem:[%s1] sm:$0xff]
    %v25 = vld [vmem:[%s1 + $0x8] sm:$0xff]
    %v26 = vld [vmem:[%s1 + $0x10] sm:$0xff]
    %v27 = vld [vmem:[%s1 + $0x18] sm:$0xff]
    %29 = vset.pattern.permute.xlu0 0
    %30 = vperm.xlu0 %29, %v24
    %v31 = vpop.permute.xlu0 %30
    %34 = vset.pattern.permute.xlu0 0
    %35 = vperm.xlu0 %34, %v25
    %v36 = vpop.permute.xlu0 %35
    %39 = vset.pattern.permute.xlu0 0
    %40 = vperm.xlu0 %39, %v26
    %v41 = vpop.permute.xlu0 %40
    %44 = vset.pattern.permute.xlu0 0
    %45 = vperm.xlu0 %44, %v27
    %v46 = vpop.permute.xlu0 %45
    %v49 = vperm.slane %v23, 0
    %v51 = vmul.f32 %v31, %v49
    %v52 = vmul.f32 %v36, %v49
    %v53 = vmul.f32 %v41, %v49
    %v54 = vmul.f32 %v46, %v49
    %v55 = vld [vmem:[%s2] sm:$0xff]
    %v56 = vld [vmem:[%s2 + $0x8] sm:$0xff]
    %v57 = vld [vmem:[%s2 + $0x10] sm:$0xff]
    %v58 = vld [vmem:[%s2 + $0x18] sm:$0xff]
    %60 = vset.pattern.permute.xlu0 0
    %61 = vperm.xlu0 %60, %v55
    %v62 = vpop.permute.xlu0 %61
    %65 = vset.pattern.permute.xlu0 0
    %66 = vperm.xlu0 %65, %v56
    %v67 = vpop.permute.xlu0 %66
    %70 = vset.pattern.permute.xlu0 0
    %71 = vperm.xlu0 %70, %v57
    %v72 = vpop.permute.xlu0 %71
    %75 = vset.pattern.permute.xlu0 0
    %76 = vperm.xlu0 %75, %v58
    %v77 = vpop.permute.xlu0 %76
    %v79 = vadd.f32 %v51, %v62
    %v80 = vadd.f32 %v52, %v67
    %v81 = vadd.f32 %v53, %v72
    %v82 = vadd.f32 %v54, %v77
    %v83 = vmax.f32 %v79, 0.0
    %v84 = vmax.f32 %v80, 0.0
    %v85 = vmax.f32 %v81, 0.0
    %v86 = vmax.f32 %v82, 0.0
    %v87 = vld [vmem:[%s3] sm:$0xff]
    %v88 = vld [vmem:[%s3 + $0x8] sm:$0xff]
    %v89 = vld [vmem:[%s3 + $0x10] sm:$0xff]
    %v90 = vld [vmem:[%s3 + $0x18] sm:$0xff]
    %92 = vset.pattern.permute.xlu0 0
    %93 = vperm.xlu0 %92, %v87
    %v94 = vpop.permute.xlu0 %93
    %97 = vset.pattern.permute.xlu0 0
    %98 = vperm.xlu0 %97, %v88
    %v99 = vpop.permute.xlu0 %98
    %102 = vset.pattern.permute.xlu0 0
    %103 = vperm.xlu0 %102, %v89
    %v104 = vpop.permute.xlu0 %103
    %107 = vset.pattern.permute.xlu0 0
    %108 = vperm.xlu0 %107, %v90
    %v109 = vpop.permute.xlu0 %108
    %v111 = vmul.f32 %v83, %v94
    %v112 = vmul.f32 %v84, %v99
    %v113 = vmul.f32 %v85, %v104
    %v114 = vmul.f32 %v86, %v109
    %v115 = vadd.f32 %v111, %v112
    %v116 = vadd.f32 %v115, %v113
    %v117 = vadd.f32 %v116, %v114
    %v118 = vrot.slane %v117, 4
    %v119 = vadd.f32 %v117, %v118
    %v120 = vrot.slane %v119, 2
    %v121 = vadd.f32 %v119, %v120
    %v122 = vrot.slane %v121, 1
    %v123 = vadd.f32 %v121, %v122
    %v124 = vld [vmem:[#allocation2] sm:$0x1]
    %126 = vset.pattern.permute.xlu0 0
    %127 = vperm.xlu0 %126, %v124
    %v128 = vpop.permute.xlu0 %127
    %v130 = vperm.slane %v128, 0
    %v131 = vadd.f32 %v123, %v130
    %132 = vst [vmem:[#allocation3] sm:$0x1] %v131
    // Predicated region
    $region22: #{tpu_custom_call.1} parent=1 // pred_check
      _
    $region23: #{tpu_custom_call.1} parent=1 // pred_check_branch
      %134 = sbr.rel (0) target = $region25
    $region24: #{tpu_custom_call.1} parent=1 // pred_region
      %136 = vsyncadd [#allocation4], 0
      %s138 = sshll.u32 [#allocation3], 4
      %s139 = int_to_ptr.vmem [resolvable:$true] %s138
      %s140 = sshll.u32 %s5, 4
      %s141 = int_to_ptr.hbm [resolvable:$true] %s140
      %143 = dma.vmem_to_hbm [thread:$0]  %s139, 16, %s141, [#allocation4]
    $region25: #{tpu_custom_call.1} parent=1 // pred_fallthru
      _
    // Predicated region
    $region26: #{tpu_custom_call.1} parent=1 // pred_check
      _
    $region27: #{tpu_custom_call.1} parent=1 // pred_check_branch
      %145 = sbr.rel (0) target = $region29
    $region28: #{tpu_custom_call.1} parent=1 // pred_region
      %147 = dma.done [#allocation4], 16
    $region29: #{tpu_custom_call.1} parent=1 // pred_fallthru
      _
    %148 = vsyncpa [#allocation4], 1

</llo_original>
